<compile_context>
chip_gen: v7x
topology: tpu7x:2x2x1
jax: 0.10.0
libtpu: 0.0.40
codegen_flags: <defaults>
</compile_context>

<pallas_src>
import functools

import jax
import jax.numpy as jnp
from jax.experimental import pallas as pl
from jax.experimental.pallas import tpu as pltpu

LANES = 128  # lane-dense output width; context and attn weights packed into it


def _make_attention_kernel(B, S, Dk, Dv, R_pad):
    """Builds the fused single-head cross-attention kernel for static shapes."""
    N = 2 * Dk + Dv  # fused projection output width

    def kernel(lhs_ref, w_ref, out_ref):
        # lhs_ref: (B, R_pad, E)   rows per batch: [0:S]=keys, [S:2S]=values,
        #                          [2S]=query, [2S+1:R_pad]=zero padding.
        # w_ref:   (E, 2Dk+Dv)     cols: [0:Dk]=wq*Dk**-0.5, [Dk:2Dk]=wk, [2Dk:]=wv.
        # out_ref: (B, 1, LANES)   lanes: [0:Dv]=context, [Dv:Dv+S]=attn weights.
        E = lhs_ref.shape[-1]

        # --- one fused projection on the MXU, M = B*R_pad -------------------
        # R_pad % 8 == 0, so the (B, R_pad, *) <-> (B*R_pad, *) reshapes are
        # sublane-aligned (no relayout copies).
        lhs2d = lhs_ref[...].reshape(B * R_pad, E)
        proj = jnp.dot(lhs2d, w_ref[...], preferred_element_type=jnp.float32)
        proj = proj.reshape(B, R_pad, N)

        k = proj[:, :S, Dk:2 * Dk]           # keys rows  x wk cols    (B, S, Dk)
        v = proj[:, S:2 * S, 2 * Dk:]        # value rows x wv cols    (B, S, Dv)
        q = proj[:, 2 * S:2 * S + 1, :Dk]    # query row  x scaled wq  (B, 1, Dk)

        # --- scores = (q / sqrt(Dk)) . k  (scale already folded into wq) ----
        scores = jnp.einsum('bqd,bsd->bqs', q, k,
                            preferred_element_type=jnp.float32)       # (B, 1, S)

        # --- numerically stable softmax with EXACT normalization ------------
        m = jnp.max(scores, axis=-1, keepdims=True)
        e = jnp.exp(scores - m)
        attn = e / jnp.sum(e, axis=-1, keepdims=True)                  # (B, 1, S)

        # --- context = attn @ v on the MXU -----------------------------------
        ctx = jnp.einsum('bqs,bsd->bqd', attn, v,
                         preferred_element_type=jnp.float32)           # (B, 1, Dv)

        # --- single lane-dense 128-wide output block (one unmasked store) ----
        pad = jnp.zeros((B, 1, LANES - Dv - S), jnp.float32)
        out_ref[...] = jnp.concatenate([ctx, attn, pad],
                                       axis=-1).astype(out_ref.dtype)

    return kernel


def fuse_attention_weights(wq, wk, wv):
    """Fuse [W_query | W_key | W_value] (each stored as (E, D) == weight.T) into
    one (E, 2*Dk+Dv) RHS, folding the 1/sqrt(Dk) score scale into W_query.
    Call ONCE at init time, not per forward (hoisted out of the hot path)."""
    Dk = wq.shape[1]
    return jnp.concatenate([wq * (float(Dk) ** -0.5), wk, wv], axis=1)


def single_attention_head(queries, keys, values, w_fused, *, kq_dim, out_dim):
    """Pallas forward. Returns (context (B,1,Dv), attn_weights (B,1,S)) like torch."""
    B, E = queries.shape
    _, S, _ = keys.shape
    Dk, Dv = kq_dim, out_dim

    # Guards for the single-block / merged-output layout (see header for the
    # S-tiled / split-projection path to implement before scaling these up).
    assert keys.shape == (B, S, E) and values.shape == (B, S, E)
    assert w_fused.shape == (E, 2 * Dk + Dv)
    assert Dv + S <= LANES, "merged lane-dense output needs Dv + S <= 128"

    # Stack [keys | values | query | zero pad] per batch so the kernel performs
    # a single projection matmul.  R_pad is sublane-aligned (multiple of 8).
    R = 2 * S + 1
    R_pad = ((R + 7) // 8) * 8
    lhs = jnp.concatenate(
        [keys, values, queries[:, None, :],
         jnp.zeros((B, R_pad - R, E), queries.dtype)], axis=1)     # (B, R_pad, E)

    vmem = pltpu.MemorySpace.VMEM
    out = pl.pallas_call(
        _make_attention_kernel(B, S, Dk, Dv, R_pad),
        out_shape=jax.ShapeDtypeStruct((B, 1, LANES), jnp.float32),
        # No grid: one invocation handles all batches (single-TC v5e/v6e gain
        # nothing from a batch grid; on v7x with large B, add a batch-chunk
        # grid axis with dimension_semantics=(pltpu.CORE_PARALLEL,)).
        in_specs=[
            pl.BlockSpec(memory_space=vmem),
            pl.BlockSpec(memory_space=vmem),
        ],
        out_specs=pl.BlockSpec(memory_space=vmem),
        compiler_params=pltpu.CompilerParams(
            vmem_limit_bytes=16 * 1024 * 1024,  # few-KiB working set; explicit budget
        ),
    )(lhs, w_fused)

    # Slice the merged lane-dense block back into torch-shaped outputs.
    # (If the consumer tolerates 128-lane-padded outputs, return `out` directly.)
    context = out[:, :, :Dv]              # (B, 1, Dv)
    attn_weights = out[:, :, Dv:Dv + S]   # (B, 1, S)
    return context, attn_weights


if __name__ == "__main__":
    # Small shapes consistent with the module's forward:
    #   queries: (B, embedding_dim); keys/values: (B, seq_len, embedding_dim)
    B, S, E, Dk, Dv = 2, 8, 32, 16, 32

    key = jax.random.PRNGKey(0)
    kq, kk, kvv, kwq, kwk, kwv = jax.random.split(key, 6)

    queries = jax.random.normal(kq, (B, E), jnp.float32)
    keys = jax.random.normal(kk, (B, S, E), jnp.float32)
    values = jax.random.normal(kvv, (B, S, E), jnp.float32)

    # Deterministic nn.Linear-style init: U(-1/sqrt(in_dim), 1/sqrt(in_dim)),
    # stored as (in_dim, out_dim) so projections are x @ W (== x @ weight.T).
    bound = float(1.0 / (E ** 0.5))
    wq = jax.random.uniform(kwq, (E, Dk), jnp.float32, -bound, bound)
    wk = jax.random.uniform(kwk, (E, Dk), jnp.float32, -bound, bound)
    wv = jax.random.uniform(kwv, (E, Dv), jnp.float32, -bound, bound)

    # Fused weight built once (init time), not per forward call.
    w_fused = fuse_attention_weights(wq, wk, wv)

    fwd = jax.jit(functools.partial(single_attention_head, kq_dim=Dk, out_dim=Dv))
    ctx, attn = fwd(queries, keys, values, w_fused)
    jax.block_until_ready((ctx, attn))

    # Pure-JAX reference (mirrors the torch forward exactly; HIGHEST precision
    # so the f32 reference matmuls are not silently done in single-pass bf16).
    hi = jax.lax.Precision.HIGHEST
    q_r = jnp.matmul(queries, wq, precision=hi)
    k_r = jnp.einsum('bse,ed->bsd', keys, wk, precision=hi)
    v_r = jnp.einsum('bse,ed->bsd', values, wv, precision=hi)
    scores_r = jnp.einsum('bd,bsd->bs', q_r, k_r, precision=hi) / jnp.sqrt(
        jnp.float32(Dk))
    w_r = jax.nn.softmax(scores_r, axis=-1)
    ctx_r = jnp.einsum('bs,bsd->bd', w_r, v_r, precision=hi)

    assert ctx.shape == (B, 1, Dv) and attn.shape == (B, 1, S)
    # Exact softmax normalization now -> tight f32-level tolerance.
    assert jnp.allclose(attn[:, 0, :], w_r, atol=2e-5, rtol=2e-5)
    assert jnp.allclose(ctx[:, 0, :], ctx_r, atol=2e-5, rtol=2e-5)

    print("KERNEL_OK")
</pallas_src>

<mosaic_0001>
module attributes {stable_mosaic.version = 11 : i64} {
  func.func @kernel(%arg0: memref<2x24x32xf32, #tpu.memory_space<vmem>>, %arg1: memref<32x64xf32, #tpu.memory_space<vmem>>, %arg2: memref<2x1x128xf32, #tpu.memory_space<vmem>>) attributes {dimension_semantics = [], scalar_prefetch = 0 : i64, scratch_operands = 0 : i64, tpu.core_type = #tpu.core_type<tc>} {
    %c0 = arith.constant 0 : index
    %c0_0 = arith.constant 0 : index
    %c0_1 = arith.constant 0 : index
    %0 = vector.load %arg0[%c0, %c0_0, %c0_1] : memref<2x24x32xf32, #tpu.memory_space<vmem>>, vector<2x24x32xf32>
    %1 = vector.shape_cast %0 : vector<2x24x32xf32> to vector<48x32xf32>
    %c0_2 = arith.constant 0 : index
    %c0_3 = arith.constant 0 : index
    %2 = vector.load %arg1[%c0_2, %c0_3] : memref<32x64xf32, #tpu.memory_space<vmem>>, vector<32x64xf32>
    %cst = arith.constant dense<0.000000e+00> : vector<48x64xf32>
    %3 = tpu.matmul %1, %2, %cst {dimension_numbers = #tpu.dot_dimension_numbers<[1], [0], [0], [1], [0, 0, 1, 1], [], []>} : vector<48x32xf32>, vector<32x64xf32>, vector<48x64xf32> -> vector<48x64xf32>
    %4 = vector.shape_cast %3 : vector<48x64xf32> to vector<2x24x64xf32>
    %5 = vector.extract_strided_slice %4 {offsets = [0, 0, 16], sizes = [2, 8, 16], strides = [1, 1, 1]} : vector<2x24x64xf32> to vector<2x8x16xf32>
    %6 = vector.extract_strided_slice %4 {offsets = [0, 8, 32], sizes = [2, 8, 32], strides = [1, 1, 1]} : vector<2x24x64xf32> to vector<2x8x32xf32>
    %7 = vector.extract_strided_slice %4 {offsets = [0, 16, 0], sizes = [2, 1, 16], strides = [1, 1, 1]} : vector<2x24x64xf32> to vector<2x1x16xf32>
    "tpu.trace_start"() <{level = 10 : i32, message = "bqd,bsd->bqs"}> : () -> ()
    %cst_4 = arith.constant dense<0.000000e+00> : vector<2x1x8xf32>
    %8 = tpu.matmul %7, %5, %cst_4 {dimension_numbers = #tpu.dot_dimension_numbers<[2], [2], [1], [1], [0, 0, 0, 1, 1, 1], [0], [0]>} : vector<2x1x16xf32>, vector<2x8x16xf32>, vector<2x1x8xf32> -> vector<2x1x8xf32>
    "tpu.trace_stop"() : () -> ()
    %cst_5 = arith.constant dense<0xFF800000> : vector<2x1xf32>
    %9 = vector.multi_reduction <maximumf>, %8, %cst_5 [2] : vector<2x1x8xf32> to vector<2x1xf32>
    %10 = vector.shape_cast %9 : vector<2x1xf32> to vector<2x1x1xf32>
    %11 = vector.broadcast %10 : vector<2x1x1xf32> to vector<2x1x8xf32>
    %12 = arith.subf %8, %11 : vector<2x1x8xf32>
    %13 = math.exp %12 : vector<2x1x8xf32>
    %cst_6 = arith.constant dense<0.000000e+00> : vector<2x1xf32>
    %14 = vector.multi_reduction <add>, %13, %cst_6 [2] : vector<2x1x8xf32> to vector<2x1xf32>
    %15 = vector.shape_cast %14 : vector<2x1xf32> to vector<2x1x1xf32>
    %16 = vector.broadcast %15 : vector<2x1x1xf32> to vector<2x1x8xf32>
    %17 = arith.divf %13, %16 : vector<2x1x8xf32>
    "tpu.trace_start"() <{level = 10 : i32, message = "bqs,bsd->bqd"}> : () -> ()
    %cst_7 = arith.constant dense<0.000000e+00> : vector<2x1x32xf32>
    %18 = tpu.matmul %17, %6, %cst_7 {dimension_numbers = #tpu.dot_dimension_numbers<[2], [1], [1], [2], [0, 0, 0, 1, 1, 2], [0], [0]>} : vector<2x1x8xf32>, vector<2x8x32xf32>, vector<2x1x32xf32> -> vector<2x1x32xf32>
    %cst_8 = arith.constant 0.000000e+00 : f32
    "tpu.trace_stop"() : () -> ()
    %19 = vector.broadcast %cst_8 : f32 to vector<2x1x88xf32>
    %20 = tpu.concatenate %18, %17, %19 in 2 : vector<2x1x32xf32>, vector<2x1x8xf32>, vector<2x1x88xf32> -> vector<2x1x128xf32>
    %c0_9 = arith.constant 0 : index
    %c0_10 = arith.constant 0 : index
    %c0_11 = arith.constant 0 : index
    %21 = vector.load %arg2[%c0_9, %c0_10, %c0_11] : memref<2x1x128xf32, #tpu.memory_space<vmem>>, vector<2x1x128xf32>
    tpu.vector_store %arg2[%c0_9, %c0_10, %c0_11], %20 {strides = array<i32>} : memref<2x1x128xf32, #tpu.memory_space<vmem>>, vector<2x1x128xf32>,
    return
  }
}

</mosaic_0001>

<llo_original>
// kernel: single_attention_head.1
$region0: #{single_attention_head.1}
  #allocation0 [shape = 'u32[]', space=smem, size = 0x4, offset = 0x4, fixed_abs, tag = 'smem constant byte address 0x4 - core index']
  #allocation1 [shape = 'u32[144,128]{1,0:T(1,128)}', space=vmem, size = 0x12000, scoped, tag = 'internal scratch']
  %s0 = inlined_call_operand.vmem [shape: f32[2,24,32], index: 0, kind: input, shape index: {}]
  %s1 = inlined_call_operand.vmem [shape: f32[32,64], index: 1, kind: input, shape index: {}]
  %s2 = inlined_call_operand.vmem [shape: f32[2,1,128], index: 2, kind: output, shape index: {}]
  %s3 = sld [smem:[#allocation0]]
  $region18: #{single_attention_head.1} parent=0
    _
  %s5 = ssub.s32 1, %s3
  %s6 = scalar_select 0, %s5, %s3
  // Predicated region
  $region2: #{single_attention_head.1} parent=0 // pred_check
    _
  $region3: #{single_attention_head.1} parent=0 // pred_check_branch
    %8 = sbr.rel (0) target = $region5
  $region4: #{single_attention_head.1} parent=0 // pred_region
    _
  $region5: #{single_attention_head.1} parent=0 // pred_fallthru
    _
  // Predicated region
  $region6: #{single_attention_head.1} parent=0 // pred_check
    _
  $region7: #{single_attention_head.1} parent=0 // pred_check_branch
    %10 = sbr.rel (0) target = $region9
  $region8: #{single_attention_head.1} parent=0 // pred_region
    _
  $region9: #{single_attention_head.1} parent=0 // pred_fallthru
    _
  %v11 = vld [vmem:[%s0] sm:$0xff]
  %v12 = vld [vmem:[%s0 + $0x8] sm:$0xff]
  %v13 = vld [vmem:[%s0 + $0x10] sm:$0xff]
  %v14 = vld [vmem:[%s0 + $0x18] sm:$0xff]
  %v15 = vld [vmem:[%s0 + $0x20] sm:$0xff]
  %v16 = vld [vmem:[%s0 + $0x28] sm:$0xff]
  %v17 = vld [vmem:[%s1] sm:$0xff]
  %v18 = vld [vmem:[%s1 + $0x8] sm:$0xff]
  %v19 = vld [vmem:[%s1 + $0x10] sm:$0xff]
  %v20 = vld [vmem:[%s1 + $0x18] sm:$0xff]
  %vm21 = vcmask 261120
  %v23 = vsel %vm21, %v11, 0
  %v26 = vsel %vm21, %v12, 0
  %v29 = vsel %vm21, %v13, 0
  %v32 = vsel %vm21, %v14, 0
  %v35 = vsel %vm21, %v15, 0
  %v38 = vsel %vm21, %v16, 0
  %40 = vmatprep.subr.mxu0 0.0
  %41 = vmatpush1.msra.mxu0 %v17
  %42 = vmatprep.subr.mxu0 0.0
  %43 = vmatpush1.msra.mxu0 %v18
  %44 = vmatprep.subr.mxu0 0.0
  %45 = vmatpush1.msra.mxu0 %v19
  %46 = vmatprep.subr.mxu0 0.0
  %47 = vmatpush1.msra.mxu0 %v20
  %48 = vmatprep.subr.mxu0 0.0
  %49 = vmatpush1.msra.mxu0 0.0
  %50 = vmatprep.subr.mxu0 0.0
  %51 = vmatpush1.msra.mxu0 0.0
  %52 = vmatprep.subr.mxu0 0.0
  %53 = vmatpush1.msra.mxu0 0.0
  %54 = vmatprep.subr.mxu0 0.0
  %55 = vmatpush1.msra.mxu0 0.0
  %56 = vmatprep.subr.mxu0 0.0
  %57 = vmatpush1.msra.mxu0 0.0
  %58 = vmatprep.subr.mxu0 0.0
  %59 = vmatpush1.msra.mxu0 0.0
  %60 = vmatprep.subr.mxu0 0.0
  %61 = vmatpush1.msra.mxu0 0.0
  %62 = vmatprep.subr.mxu0 0.0
  %63 = vmatpush1.msra.mxu0 0.0
  %64 = vmatprep.subr.mxu0 0.0
  %65 = vmatpush1.msra.mxu0 0.0
  %66 = vmatprep.subr.mxu0 0.0
  %67 = vmatpush1.msra.mxu0 0.0
  %68 = vmatprep.subr.mxu0 0.0
  %69 = vmatpush1.msra.mxu0 0.0
  %70 = vmatprep.subr.mxu0 0.0
  %71 = vmatpush1.msra.mxu0 0.0
  %72 = vmatprep.subr.mxu0 0.0
  %73 = vmatpush1.msra.mxu0 0.0
  %74 = vmatprep.subr.mxu0 0.0
  %75 = vmatpush1.msra.mxu0 0.0
  %76 = vmatprep.subr.mxu0 0.0
  %77 = vmatpush1.msra.mxu0 0.0
  %78 = vmatprep.subr.mxu0 0.0
  %79 = vmatpush1.msra.mxu0 0.0
  %80 = vmatprep.subr.mxu0 0.0
  %81 = vmatpush1.msra.mxu0 0.0
  %82 = vmatprep.subr.mxu0 0.0
  %83 = vmatpush1.msra.mxu0 0.0
  %84 = vmatprep.subr.mxu0 0.0
  %85 = vmatpush1.msra.mxu0 0.0
  %86 = vmatprep.subr.mxu0 0.0
  %87 = vmatpush1.msra.mxu0 0.0
  %88 = vmatprep.subr.mxu0 0.0
  %89 = vmatpush1.msra.mxu0 0.0
  %90 = vmatprep.subr.mxu0 0.0
  %91 = vmatpush1.msra.mxu0 0.0
  %92 = vmatprep.subr.mxu0 0.0
  %93 = vmatpush1.msra.mxu0 0.0
  %94 = vmatprep.subr.mxu0 0.0
  %95 = vmatpush1.msra.mxu0 0.0
  %96 = vmatprep.subr.mxu0 0.0
  %97 = vmatpush1.msra.mxu0 0.0
  %98 = vmatprep.subr.mxu0 0.0
  %99 = vmatpush1.msra.mxu0 0.0
  %100 = vmatprep.subr.mxu0 0.0
  %101 = vmatpush1.msra.mxu0 0.0
  %102 = vmatprep.subr.mxu0 0.0
  %103 = vmatpush1.msra.mxu0 0.0
  %104 = vmatprep.mubr.f32.mxu0 0.0
  %105 = vmatmul.mubr.f32.gmra.mrb[0].mxu0 %v23
  %v106 = vpop.f32.mrb[0].mxu0
  %v107 = vadd.f32 0.0, %v106
  %v108 = vpop.f32.mrb[0].mxu0
  %109 = vmatprep.mubr.f32.mxu0 0.0
  %110 = vmatmul.mubr.f32.gmra.mrb[0].mxu0 %v26
  %v111 = vpop.f32.mrb[0].mxu0
  %v112 = vadd.f32 0.0, %v111
  %v113 = vpop.f32.mrb[0].mxu0
  %114 = vmatprep.mubr.f32.mxu0 0.0
  %115 = vmatmul.mubr.f32.gmra.mrb[0].mxu0 %v29
  %v116 = vpop.f32.mrb[0].mxu0
  %v117 = vadd.f32 0.0, %v116
  %v118 = vpop.f32.mrb[0].mxu0
  %119 = vmatprep.mubr.f32.mxu0 0.0
  %120 = vmatmul.mubr.f32.gmra.mrb[0].mxu0 %v32
  %v121 = vpop.f32.mrb[0].mxu0
  %v122 = vadd.f32 0.0, %v121
  %v123 = vpop.f32.mrb[0].mxu0
  %124 = vmatprep.mubr.f32.mxu0 0.0
  %125 = vmatmul.mubr.f32.gmra.mrb[0].mxu0 %v35
  %v126 = vpop.f32.mrb[0].mxu0
  %v127 = vadd.f32 0.0, %v126
  %v128 = vpop.f32.mrb[0].mxu0
  %129 = vmatprep.mubr.f32.mxu0 0.0
  %130 = vmatmul.mubr.f32.gmra.mrb[0].mxu0 %v38
  %v131 = vpop.f32.mrb[0].mxu0
  %v132 = vadd.f32 0.0, %v131
  %v133 = vpop.f32.mrb[0].mxu0
  %134 = vdwg.mxu0
  %136 = vrot.lane.b32.xlu0 %v107, 112
  %v137 = vpop.permute.xlu0 %136
  %vm138 = vcmask 130048
  %v140 = vsel %vm138, %v117, 0
  %v142 = vsel %vm138, %v137, 0
  %144 = vmatprep.subr.mxu0 0.0
  %145 = vmatpush1.xpose.msra.mxu0 %v142
  %146 = vmatprep.subr.mxu0 0.0
  %147 = vmatpush1.xpose.msra.mxu0 0.0
  %148 = vmatprep.subr.mxu0 0.0
  %149 = vmatpush1.xpose.msra.mxu0 0.0
  %150 = vmatprep.subr.mxu0 0.0
  %151 = vmatpush1.xpose.msra.mxu0 0.0
  %152 = vmatprep.subr.mxu0 0.0
  %153 = vmatpush1.xpose.msra.mxu0 0.0
  %154 = vmatprep.subr.mxu0 0.0
  %155 = vmatpush1.xpose.msra.mxu0 0.0
  %156 = vmatprep.subr.mxu0 0.0
  %157 = vmatpush1.xpose.msra.mxu0 0.0
  %158 = vmatprep.subr.mxu0 0.0
  %159 = vmatpush1.xpose.msra.mxu0 0.0
  %160 = vmatprep.subr.mxu0 0.0
  %161 = vmatpush1.xpose.msra.mxu0 0.0
  %162 = vmatprep.subr.mxu0 0.0
  %163 = vmatpush1.xpose.msra.mxu0 0.0
  %164 = vmatprep.subr.mxu0 0.0
  %165 = vmatpush1.xpose.msra.mxu0 0.0
  %166 = vmatprep.subr.mxu0 0.0
  %167 = vmatpush1.xpose.msra.mxu0 0.0
  %168 = vmatprep.subr.mxu0 0.0
  %169 = vmatpush1.xpose.msra.mxu0 0.0
  %170 = vmatprep.subr.mxu0 0.0
  %171 = vmatpush1.xpose.msra.mxu0 0.0
  %172 = vmatprep.subr.mxu0 0.0
  %173 = vmatpush1.xpose.msra.mxu0 0.0
  %174 = vmatprep.subr.mxu0 0.0
  %175 = vmatpush1.xpose.msra.mxu0 0.0
  %176 = vmatprep.subr.mxu0 0.0
  %177 = vmatpush1.xpose.msra.mxu0 0.0
  %178 = vmatprep.subr.mxu0 0.0
  %179 = vmatpush1.xpose.msra.mxu0 0.0
  %180 = vmatprep.subr.mxu0 0.0
  %181 = vmatpush1.xpose.msra.mxu0 0.0
  %182 = vmatprep.subr.mxu0 0.0
  %183 = vmatpush1.xpose.msra.mxu0 0.0
  %184 = vmatprep.subr.mxu0 0.0
  %185 = vmatpush1.xpose.msra.mxu0 0.0
  %186 = vmatprep.subr.mxu0 0.0
  %187 = vmatpush1.xpose.msra.mxu0 0.0
  %188 = vmatprep.subr.mxu0 0.0
  %189 = vmatpush1.xpose.msra.mxu0 0.0
  %190 = vmatprep.subr.mxu0 0.0
  %191 = vmatpush1.xpose.msra.mxu0 0.0
  %192 = vmatprep.subr.mxu0 0.0
  %193 = vmatpush1.xpose.msra.mxu0 0.0
  %194 = vmatprep.subr.mxu0 0.0
  %195 = vmatpush1.xpose.msra.mxu0 0.0
  %196 = vmatprep.subr.mxu0 0.0
  %197 = vmatpush1.xpose.msra.mxu0 0.0
  %198 = vmatprep.subr.mxu0 0.0
  %199 = vmatpush1.xpose.msra.mxu0 0.0
  %200 = vmatprep.subr.mxu0 0.0
  %201 = vmatpush1.xpose.msra.mxu0 0.0
  %202 = vmatprep.subr.mxu0 0.0
  %203 = vmatpush1.xpose.msra.mxu0 0.0
  %204 = vmatprep.subr.mxu0 0.0
  %205 = vmatpush1.xpose.msra.mxu0 0.0
  %206 = vmatprep.subr.mxu0 0.0
  %207 = vmatpush1.xpose.msra.mxu0 0.0
  %208 = vmatprep.mubr.f32.mxu0 0.0
  %209 = vmatmul.mubr.f32.gmra.mrb[0].mxu0 %v140
  %v210 = vpop.f32.mrb[0].mxu0
  %v211 = vadd.f32 0.0, %v210
  %v212 = vpop.f32.mrb[0].mxu0
  %213 = vdwg.mxu0
  %215 = vrot.lane.b32.xlu0 %v122, 112
  %v216 = vpop.permute.xlu0 %215
  %v218 = vsel %vm138, %v132, 0
  %v220 = vsel %vm138, %v216, 0
  %222 = vmatprep.subr.mxu0 0.0
  %223 = vmatpush1.xpose.msra.mxu0 %v220
  %224 = vmatprep.subr.mxu0 0.0
  %225 = vmatpush1.xpose.msra.mxu0 0.0
  %226 = vmatprep.subr.mxu0 0.0
  %227 = vmatpush1.xpose.msra.mxu0 0.0
  %228 = vmatprep.subr.mxu0 0.0
  %229 = vmatpush1.xpose.msra.mxu0 0.0
  %230 = vmatprep.subr.mxu0 0.0
  %231 = vmatpush1.xpose.msra.mxu0 0.0
  %232 = vmatprep.subr.mxu0 0.0
  %233 = vmatpush1.xpose.msra.mxu0 0.0
  %234 = vmatprep.subr.mxu0 0.0
  %235 = vmatpush1.xpose.msra.mxu0 0.0
  %236 = vmatprep.subr.mxu0 0.0
  %237 = vmatpush1.xpose.msra.mxu0 0.0
  %238 = vmatprep.subr.mxu0 0.0
  %239 = vmatpush1.xpose.msra.mxu0 0.0
  %240 = vmatprep.subr.mxu0 0.0
  %241 = vmatpush1.xpose.msra.mxu0 0.0
  %242 = vmatprep.subr.mxu0 0.0
  %243 = vmatpush1.xpose.msra.mxu0 0.0
  %244 = vmatprep.subr.mxu0 0.0
  %245 = vmatpush1.xpose.msra.mxu0 0.0
  %246 = vmatprep.subr.mxu0 0.0
  %247 = vmatpush1.xpose.msra.mxu0 0.0
  %248 = vmatprep.subr.mxu0 0.0
  %249 = vmatpush1.xpose.msra.mxu0 0.0
  %250 = vmatprep.subr.mxu0 0.0
  %251 = vmatpush1.xpose.msra.mxu0 0.0
  %252 = vmatprep.subr.mxu0 0.0
  %253 = vmatpush1.xpose.msra.mxu0 0.0
  %254 = vmatprep.subr.mxu0 0.0
  %255 = vmatpush1.xpose.msra.mxu0 0.0
  %256 = vmatprep.subr.mxu0 0.0
  %257 = vmatpush1.xpose.msra.mxu0 0.0
  %258 = vmatprep.subr.mxu0 0.0
  %259 = vmatpush1.xpose.msra.mxu0 0.0
  %260 = vmatprep.subr.mxu0 0.0
  %261 = vmatpush1.xpose.msra.mxu0 0.0
  %262 = vmatprep.subr.mxu0 0.0
  %263 = vmatpush1.xpose.msra.mxu0 0.0
  %264 = vmatprep.subr.mxu0 0.0
  %265 = vmatpush1.xpose.msra.mxu0 0.0
  %266 = vmatprep.subr.mxu0 0.0
  %267 = vmatpush1.xpose.msra.mxu0 0.0
  %268 = vmatprep.subr.mxu0 0.0
  %269 = vmatpush1.xpose.msra.mxu0 0.0
  %270 = vmatprep.subr.mxu0 0.0
  %271 = vmatpush1.xpose.msra.mxu0 0.0
  %272 = vmatprep.subr.mxu0 0.0
  %273 = vmatpush1.xpose.msra.mxu0 0.0
  %274 = vmatprep.subr.mxu0 0.0
  %275 = vmatpush1.xpose.msra.mxu0 0.0
  %276 = vmatprep.subr.mxu0 0.0
  %277 = vmatpush1.xpose.msra.mxu0 0.0
  %278 = vmatprep.subr.mxu0 0.0
  %279 = vmatpush1.xpose.msra.mxu0 0.0
  %280 = vmatprep.subr.mxu0 0.0
  %281 = vmatpush1.xpose.msra.mxu0 0.0
  %282 = vmatprep.subr.mxu0 0.0
  %283 = vmatpush1.xpose.msra.mxu0 0.0
  %284 = vmatprep.subr.mxu0 0.0
  %285 = vmatpush1.xpose.msra.mxu0 0.0
  %286 = vmatprep.mubr.f32.mxu0 0.0
  %287 = vmatmul.mubr.f32.gmra.mrb[0].mxu0 %v218
  %v288 = vpop.f32.mrb[0].mxu0
  %v289 = vadd.f32 0.0, %v288
  %v290 = vpop.f32.mrb[0].mxu0
  %291 = vdwg.mxu0
  %vm292 = vcmask 57344
  %v293 = vsel %vm292, %v211, -inf
  %294 = vmax.xlane.f32.xlu0 %v293
  %v295 = vpop.xlane.xlu0 %294
  %v296 = vsel %vm292, %v289, -inf
  %297 = vmax.xlane.f32.xlu0 %v296
  %v298 = vpop.xlane.xlu0 %297
  %v299 = vsub.f32 %v211, %v295
  %v300 = vsub.f32 %v289, %v298
  %v301 = vmul.f32 %v299, 1.442695
  %v302 = vpow.pop %v301
  %v303 = vmul.f32 %v300, 1.442695
  %v304 = vpow.pop %v303
  %v305 = vsel %vm292, %v302, 0.0
  %306 = vadd.xlane.f32.xlu0 %v305
  %v307 = vpop.xlane.xlu0 %306
  %v308 = vsel %vm292, %v304, 0.0
  %309 = vadd.xlane.f32.xlu0 %v308
  %v310 = vpop.xlane.xlu0 %309
  %v311 = vrcp.pop %v307
  %v312 = vmul.f32 %v302, %v311
  %v313 = vrcp.pop %v310
  %v314 = vmul.f32 %v304, %v313
  %316 = vrot.lane.b32.xlu0 %v112, 96
  %v317 = vpop.permute.xlu0 %316
  %vm319 = vcmask 64512
  %v321 = vsel %vm319, %v312, 0
  %323 = vmatprep.subr.mxu0 0.0
  %324 = vmatpush1.msra.mxu0 %v317
  %325 = vmatprep.subr.mxu0 0.0
  %326 = vmatpush1.msra.mxu0 0.0
  %327 = vmatprep.subr.mxu0 0.0
  %328 = vmatpush1.msra.mxu0 0.0
  %329 = vmatprep.subr.mxu0 0.0
  %330 = vmatpush1.msra.mxu0 0.0
  %331 = vmatprep.subr.mxu0 0.0
  %332 = vmatpush1.msra.mxu0 0.0
  %333 = vmatprep.subr.mxu0 0.0
  %334 = vmatpush1.msra.mxu0 0.0
  %335 = vmatprep.subr.mxu0 0.0
  %336 = vmatpush1.msra.mxu0 0.0
  %337 = vmatprep.subr.mxu0 0.0
  %338 = vmatpush1.msra.mxu0 0.0
  %339 = vmatprep.subr.mxu0 0.0
  %340 = vmatpush1.msra.mxu0 0.0
  %341 = vmatprep.subr.mxu0 0.0
  %342 = vmatpush1.msra.mxu0 0.0
  %343 = vmatprep.subr.mxu0 0.0
  %344 = vmatpush1.msra.mxu0 0.0
  %345 = vmatprep.subr.mxu0 0.0
  %346 = vmatpush1.msra.mxu0 0.0
  %347 = vmatprep.subr.mxu0 0.0
  %348 = vmatpush1.msra.mxu0 0.0
  %349 = vmatprep.subr.mxu0 0.0
  %350 = vmatpush1.msra.mxu0 0.0
  %351 = vmatprep.subr.mxu0 0.0
  %352 = vmatpush1.msra.mxu0 0.0
  %353 = vmatprep.subr.mxu0 0.0
  %354 = vmatpush1.msra.mxu0 0.0
  %355 = vmatprep.subr.mxu0 0.0
  %356 = vmatpush1.msra.mxu0 0.0
  %357 = vmatprep.subr.mxu0 0.0
  %358 = vmatpush1.msra.mxu0 0.0
  %359 = vmatprep.subr.mxu0 0.0
  %360 = vmatpush1.msra.mxu0 0.0
  %361 = vmatprep.subr.mxu0 0.0
  %362 = vmatpush1.msra.mxu0 0.0
  %363 = vmatprep.subr.mxu0 0.0
  %364 = vmatpush1.msra.mxu0 0.0
  %365 = vmatprep.subr.mxu0 0.0
  %366 = vmatpush1.msra.mxu0 0.0
  %367 = vmatprep.subr.mxu0 0.0
  %368 = vmatpush1.msra.mxu0 0.0
  %369 = vmatprep.subr.mxu0 0.0
  %370 = vmatpush1.msra.mxu0 0.0
  %371 = vmatprep.subr.mxu0 0.0
  %372 = vmatpush1.msra.mxu0 0.0
  %373 = vmatprep.subr.mxu0 0.0
  %374 = vmatpush1.msra.mxu0 0.0
  %375 = vmatprep.subr.mxu0 0.0
  %376 = vmatpush1.msra.mxu0 0.0
  %377 = vmatprep.subr.mxu0 0.0
  %378 = vmatpush1.msra.mxu0 0.0
  %379 = vmatprep.subr.mxu0 0.0
  %380 = vmatpush1.msra.mxu0 0.0
  %381 = vmatprep.subr.mxu0 0.0
  %382 = vmatpush1.msra.mxu0 0.0
  %383 = vmatprep.subr.mxu0 0.0
  %384 = vmatpush1.msra.mxu0 0.0
  %385 = vmatprep.subr.mxu0 0.0
  %386 = vmatpush1.msra.mxu0 0.0
  %387 = vmatprep.mubr.f32.mxu0 0.0
  %388 = vmatmul.mubr.f32.gmra.mrb[0].mxu0 %v321
  %v389 = vpop.f32.mrb[0].mxu0
  %v390 = vadd.f32 0.0, %v389
  %v391 = vpop.f32.mrb[0].mxu0
  %392 = vdwg.mxu0
  %394 = vrot.lane.b32.xlu0 %v127, 96
  %v395 = vpop.permute.xlu0 %394
  %v398 = vsel %vm319, %v314, 0
  %400 = vmatprep.subr.mxu0 0.0
  %401 = vmatpush1.msra.mxu0 %v395
  %402 = vmatprep.subr.mxu0 0.0
  %403 = vmatpush1.msra.mxu0 0.0
  %404 = vmatprep.subr.mxu0 0.0
  %405 = vmatpush1.msra.mxu0 0.0
  %406 = vmatprep.subr.mxu0 0.0
  %407 = vmatpush1.msra.mxu0 0.0
  %408 = vmatprep.subr.mxu0 0.0
  %409 = vmatpush1.msra.mxu0 0.0
  %410 = vmatprep.subr.mxu0 0.0
  %411 = vmatpush1.msra.mxu0 0.0
  %412 = vmatprep.subr.mxu0 0.0
  %413 = vmatpush1.msra.mxu0 0.0
  %414 = vmatprep.subr.mxu0 0.0
  %415 = vmatpush1.msra.mxu0 0.0
  %416 = vmatprep.subr.mxu0 0.0
  %417 = vmatpush1.msra.mxu0 0.0
  %418 = vmatprep.subr.mxu0 0.0
  %419 = vmatpush1.msra.mxu0 0.0
  %420 = vmatprep.subr.mxu0 0.0
  %421 = vmatpush1.msra.mxu0 0.0
  %422 = vmatprep.subr.mxu0 0.0
  %423 = vmatpush1.msra.mxu0 0.0
  %424 = vmatprep.subr.mxu0 0.0
  %425 = vmatpush1.msra.mxu0 0.0
  %426 = vmatprep.subr.mxu0 0.0
  %427 = vmatpush1.msra.mxu0 0.0
  %428 = vmatprep.subr.mxu0 0.0
  %429 = vmatpush1.msra.mxu0 0.0
  %430 = vmatprep.subr.mxu0 0.0
  %431 = vmatpush1.msra.mxu0 0.0
  %432 = vmatprep.subr.mxu0 0.0
  %433 = vmatpush1.msra.mxu0 0.0
  %434 = vmatprep.subr.mxu0 0.0
  %435 = vmatpush1.msra.mxu0 0.0
  %436 = vmatprep.subr.mxu0 0.0
  %437 = vmatpush1.msra.mxu0 0.0
  %438 = vmatprep.subr.mxu0 0.0
  %439 = vmatpush1.msra.mxu0 0.0
  %440 = vmatprep.subr.mxu0 0.0
  %441 = vmatpush1.msra.mxu0 0.0
  %442 = vmatprep.subr.mxu0 0.0
  %443 = vmatpush1.msra.mxu0 0.0
  %444 = vmatprep.subr.mxu0 0.0
  %445 = vmatpush1.msra.mxu0 0.0
  %446 = vmatprep.subr.mxu0 0.0
  %447 = vmatpush1.msra.mxu0 0.0
  %448 = vmatprep.subr.mxu0 0.0
  %449 = vmatpush1.msra.mxu0 0.0
  %450 = vmatprep.subr.mxu0 0.0
  %451 = vmatpush1.msra.mxu0 0.0
  %452 = vmatprep.subr.mxu0 0.0
  %453 = vmatpush1.msra.mxu0 0.0
  %454 = vmatprep.subr.mxu0 0.0
  %455 = vmatpush1.msra.mxu0 0.0
  %456 = vmatprep.subr.mxu0 0.0
  %457 = vmatpush1.msra.mxu0 0.0
  %458 = vmatprep.subr.mxu0 0.0
  %459 = vmatpush1.msra.mxu0 0.0
  %460 = vmatprep.subr.mxu0 0.0
  %461 = vmatpush1.msra.mxu0 0.0
  %462 = vmatprep.subr.mxu0 0.0
  %463 = vmatpush1.msra.mxu0 0.0
  %464 = vmatprep.mubr.f32.mxu0 0.0
  %465 = vmatmul.mubr.f32.gmra.mrb[0].mxu0 %v398
  %v466 = vpop.f32.mrb[0].mxu0
  %v467 = vadd.f32 0.0, %v466
  %v468 = vpop.f32.mrb[0].mxu0
  %469 = vdwg.mxu0
  %470 = vrot.lane.b32.xlu0 %v312, 32
  %v471 = vpop.permute.xlu0 %470
  %472 = vrot.lane.b32.xlu0 %v314, 32
  %v473 = vpop.permute.xlu0 %472
  %v476 = vsel %vm21, %v390, %v471
  %v477 = vsel %vm21, %v467, %v473
  %vm478 = vcmask 326656
  %v479 = vsel %vm478, %v476, 0.0
  %v480 = vsel %vm478, %v477, 0.0
  %481 = vst [vmem:[%s2] sm:$0x1] %v479
  %482 = vst [vmem:[%s2 + $0x1] sm:$0x1] %v480
  // Predicated region
  $region10: #{single_attention_head.1} parent=0 // pred_check
    _
  $region11: #{single_attention_head.1} parent=0 // pred_check_branch
    %484 = sbr.rel (0) target = $region13
  $region12: #{single_attention_head.1} parent=0 // pred_region
    _
  $region13: #{single_attention_head.1} parent=0 // pred_fallthru
    _
  // Predicated region
  $region14: #{single_attention_head.1} parent=0 // pred_check
    _
  $region15: #{single_attention_head.1} parent=0 // pred_check_branch
    %486 = sbr.rel (0) target = $region17
  $region16: #{single_attention_head.1} parent=0 // pred_region
    _
  $region17: #{single_attention_head.1} parent=0 // pred_fallthru
    _

</llo_original>
